<compile_context>
chip_gen: v7x
topology: tpu7x:2x2x1
jax: 0.10.0
libtpu: 0.0.40
codegen_flags: <defaults>
</compile_context>

<pallas_src>
from functools import partial

import jax
import jax.numpy as jnp
from jax import lax
from jax.experimental import pallas as pl
from jax.experimental.pallas import tpu as pltpu


_MAX_COL_TILE = 2048          # <= 8 unrolled 256-wide MXU chunks per grid step
_MAX_ROW_TILE = 4096
_VMEM_LIMIT = 48 * 1024 * 1024


def _device_kind():
    try:
        return jax.devices()[0].device_kind.lower()
    except Exception:
        return ""


def _block_budget_bytes():
    """Per-grid-step input-byte budget, sized per TPU generation."""
    kind = _device_kind()
    if "v2" in kind or "v3" in kind:
        return 2 * 1024 * 1024
    if "v5 lite" in kind or "v5lite" in kind or "v5e" in kind:
        return 4 * 1024 * 1024            # 16 MiB default scoped VMEM
    if "v6" in kind:
        return 8 * 1024 * 1024            # ~95% of the 1.4 TB/s roofline
    if "v7" in kind or "7x" in kind:
        return 12 * 1024 * 1024           # amortize step cost at 3.2 TB/s
    return 6 * 1024 * 1024


def _vmem_limit_bytes():
    kind = _device_kind()
    if "v2" in kind or "v3" in kind:
        return None                        # tiny physical VMEM; keep defaults
    return _VMEM_LIMIT


def _row_align(itemsize):
    # 8 rows for f32, 16 for bf16, 32 for int8/fp8 (native sublane packing).
    return max(8, 32 // max(1, itemsize))


def _pick_col_tile(w2):
    """Column tile (post-H-reduction input columns); must divide w2."""
    if w2 <= _MAX_COL_TILE:
        return w2
    for unit in (256, 128):
        t = (_MAX_COL_TILE // unit) * unit
        while t >= unit:
            if w2 % t == 0:
                return t
            t -= unit
    # TODO(synk): very wide rows with no 128-multiple divisor fall back to a
    # single full-width column block (bounded only by the row tile).
    return w2


def _pick_sub_chunk(tw):
    """Inner dim of the pair-selection matmuls (prefer 256 -> 128-lane outputs)."""
    for c in (256, 512, 128, 1024, 2048):
        if c <= tw and tw % c == 0:
            return c
    if tw <= 1024:
        return tw
    for c in range(1024, 1, -2):
        if tw % c == 0:
            return c
    return tw


def _pick_row_tile(n_rows, row_step_bytes, budget, row_align):
    fit = budget // max(1, row_step_bytes)
    fit = max(row_align, min(fit, _MAX_ROW_TILE))
    if n_rows <= fit:
        return n_rows                      # full dim: always a legal block shape
    return max(row_align, (fit // row_align) * row_align)


def _make_pool_kernel(op, two_d, split, half, n_sub, c_sub, c_half, scale):
    """Pool kernel over one (row-block, column-block) grid cell.

    split (2D fast path): a_ref / b_ref hold the h-even / h-odd column blocks.
    non-split (2D small / odd widths): x_ref holds the full [even|odd] row.
    1D: x_ref holds the column block directly.
    """
    use_concat = (op == "max") and (c_half % 128 == 0)

    def kernel(*refs):
        if two_d and split:
            a_ref, b_ref, out_ref = refs
            in_dtype = a_ref.dtype
        else:
            x_ref, out_ref = refs
            in_dtype = x_ref.dtype

        # Selection matrices built in-kernel (no operands, no extra VMEM bufs).
        if op == "max":
            if use_concat:
                # [even-select | odd-select]: one full-width MXU matmul/chunk.
                k = lax.broadcasted_iota(jnp.int32, (c_sub, 2 * c_half), 0)
                jj = lax.broadcasted_iota(jnp.int32, (c_sub, 2 * c_half), 1)
                tgt = jnp.where(jj < c_half, 2 * jj, 2 * (jj - c_half) + 1)
                sel_cat = (k == tgt).astype(in_dtype)
            else:
                k = lax.broadcasted_iota(jnp.int32, (c_sub, c_half), 0)
                j = lax.broadcasted_iota(jnp.int32, (c_sub, c_half), 1)
                sel_even = (k == 2 * j).astype(in_dtype)
                sel_odd = (k == 2 * j + 1).astype(in_dtype)
        else:
            k = lax.broadcasted_iota(jnp.int32, (c_sub, c_half), 0)
            j = lax.broadcasted_iota(jnp.int32, (c_sub, c_half), 1)
            # avg scale folded into the selection matrix (0.5/0.25 are exact).
            sel_sum = jnp.where(k // 2 == j, scale, 0.0).astype(in_dtype)

        if two_d and not split:
            # Small / oddly-sized rows: proven full-block path.
            x = x_ref[...]
            a_full = x[:, :half]
            b_full = x[:, half:]
            y_full = jnp.maximum(a_full, b_full) if op == "max" else a_full + b_full

        for c in range(n_sub):
            lo, hi = c * c_sub, (c + 1) * c_sub
            if two_d and split:
                a_c = a_ref[:, lo:hi]
                b_c = b_ref[:, lo:hi]
                y = jnp.maximum(a_c, b_c) if op == "max" else a_c + b_c
            elif two_d:
                y = y_full[:, lo:hi]
            else:
                y = x_ref[:, lo:hi]

            if op == "max":
                if use_concat:
                    r = jnp.dot(y, sel_cat, preferred_element_type=jnp.float32)
                    r = jnp.maximum(r[:, :c_half], r[:, c_half:])
                else:
                    ev = jnp.dot(y, sel_even, preferred_element_type=jnp.float32)
                    od = jnp.dot(y, sel_odd, preferred_element_type=jnp.float32)
                    r = jnp.maximum(ev, od)
            else:
                r = jnp.dot(y, sel_sum, preferred_element_type=jnp.float32)
            out_ref[:, c * c_half:(c + 1) * c_half] = r.astype(out_ref.dtype)

    return kernel


def _pool_rows(x2, *, op, two_d, out_w):
    """x2: (R, Win) contiguous row view.  Win = 2*out_w (1D) or 4*out_w (2D)."""
    R, Win = x2.shape
    dtype = x2.dtype
    itemsize = jnp.dtype(dtype).itemsize
    w2 = Win // 2 if two_d else Win          # width left after the 2D H-reduce
    assert w2 == 2 * out_w

    tw = _pick_col_tile(w2)
    c_sub = _pick_sub_chunk(tw)
    c_half = c_sub // 2
    n_sub = tw // c_sub
    n_col = w2 // tw
    out_tw = tw // 2

    # 2D: split into h-even / h-odd column-tiled operands only when the
    # per-operand block width is (8,128)-tileable.
    split = two_d and (tw % 128 == 0)

    row_step_bytes = (2 if two_d else 1) * tw * itemsize
    tr = _pick_row_tile(R, row_step_bytes, _block_budget_bytes(),
                        _row_align(itemsize))
    grid = (pl.cdiv(R, tr), n_col)

    if two_d and split:
        in_specs = [
            pl.BlockSpec((tr, tw), lambda i, j: (i, j)),
            pl.BlockSpec((tr, tw), lambda i, j, _off=n_col: (i, j + _off)),
        ]
        operands = (x2, x2)
    elif two_d:
        # non-split 2D always has a single full-width column block.
        assert n_col == 1 and tw == w2
        in_specs = [pl.BlockSpec((tr, Win), lambda i, j: (i, 0))]
        operands = (x2,)
    else:
        in_specs = [pl.BlockSpec((tr, tw), lambda i, j: (i, j))]
        operands = (x2,)

    out_spec = pl.BlockSpec((tr, out_tw), lambda i, j: (i, j))
    scale = 0.25 if two_d else 0.5
    kernel = _make_pool_kernel(op, two_d, split, w2, n_sub, c_sub, c_half, scale)

    mac_out = R * out_w * (2 if op == "max" else 1)
    cost = pl.CostEstimate(
        flops=int(2 * mac_out * c_sub + (R * w2 if two_d else 0)),
        transcendentals=0,
        bytes_accessed=int((R * Win + R * out_w) * itemsize),
    )

    return pl.pallas_call(
        kernel,
        out_shape=jax.ShapeDtypeStruct((R, out_w), dtype),
        grid=grid,
        in_specs=in_specs,
        out_specs=out_spec,
        compiler_params=pltpu.CompilerParams(
            dimension_semantics=("parallel", "parallel"),
            vmem_limit_bytes=_vmem_limit_bytes(),
        ),
        cost_estimate=cost,
    )(*operands)


@partial(jax.jit, static_argnums=(1,))
def pool(x, type_):
    """Equivalent of Pool(type_).forward(x).  Float dtypes, finite values."""
    if type_ in ("max", "avg"):
        op = "max" if type_ == "max" else "avg"
        N, C, L = x.shape
        Lo = L // 2
        xc = x[:, :, : 2 * Lo]                              # free for even L
        if Lo >= 128:
            x2 = xc.reshape(N * C, 2 * Lo)
            out = _pool_rows(x2, op=op, two_d=False, out_w=Lo)
        else:
            # Lane-density repack: merge channels into the row (pairs stay
            # adjacent and never straddle a channel boundary since 2*Lo is even).
            x2 = xc.reshape(N, C * 2 * Lo)
            out = _pool_rows(x2, op=op, two_d=False, out_w=C * Lo)
        return out.reshape(N, C, Lo)
    elif type_ in ("max2", "avg2"):
        op = "max" if type_ == "max2" else "avg"
        N, C, H, W = x.shape
        Ho, Wo = H // 2, W // 2
        xc = x[:, :, : 2 * Ho, : 2 * Wo]                    # free for even H, W
        x2 = xc.reshape(N * C * Ho, 4 * Wo)   # row = [h-even (2Wo) | h-odd (2Wo)]
        out = _pool_rows(x2, op=op, two_d=True, out_w=Wo)
        return out.reshape(N, C, Ho, Wo)
    else:
        raise ValueError(f"unknown pool type: {type_}")


def _ref_pool(x, type_):
    """Pure-jnp reference mirroring PyTorch pooling semantics."""
    if type_ in ("max", "avg"):
        N, C, L = x.shape
        Lo = L // 2
        w = x[:, :, : Lo * 2].reshape(N, C, Lo, 2)
        return jnp.max(w, axis=-1) if type_ == "max" else jnp.mean(w, axis=-1)
    else:
        N, C, H, W = x.shape
        Ho, Wo = H // 2, W // 2
        w = x[:, :, : Ho * 2, : Wo * 2].reshape(N, C, Ho, 2, Wo, 2)
        if type_ == "max2":
            return jnp.max(w, axis=(3, 5))
        return jnp.mean(w, axis=(3, 5))


if __name__ == "__main__":
    key = jax.random.PRNGKey(0)
    k1, k2, k3, k4, k5, k6 = jax.random.split(key, 6)

    # Small shapes matching the module's intent.
    x1d = jax.random.normal(k1, (2, 4, 16), dtype=jnp.float32)
    x2d = jax.random.normal(k2, (2, 4, 16, 16), dtype=jnp.float32)
    # Moderate shapes exercising the lane-dense, multi-chunk paths.
    x1d_big = jax.random.normal(k3, (16, 32, 2048), dtype=jnp.float32)
    x2d_big = jax.random.normal(k4, (4, 8, 128, 256), dtype=jnp.float32)
    # Shapes exercising ragged row blocks (cdiv grid) and 2D column tiling.
    x1d_wide = jax.random.normal(k5, (50, 40, 2048), dtype=jnp.float32)
    x2d_wide = jax.random.normal(k6, (2, 3, 64, 6144), dtype=jnp.float32)

    cases = [
        ("max", x1d), ("avg", x1d), ("max2", x2d), ("avg2", x2d),
        ("max", x1d_big), ("avg", x1d_big), ("max2", x2d_big), ("avg2", x2d_big),
        ("max", x1d_wide), ("avg", x1d_wide),
        ("max2", x2d_wide), ("avg2", x2d_wide),
    ]

    for t, x in cases:
        out = jax.block_until_ready(pool(x, t))
        ref = _ref_pool(x, t)
        assert out.shape == ref.shape, (t, out.shape, ref.shape)
        assert jnp.allclose(out, ref, atol=1e-5, rtol=1e-5), f"mismatch for {t}"

    print("KERNEL_OK")
</pallas_src>

<mosaic_0001>
module attributes {stable_mosaic.version = 11 : i64} {
  func.func @kernel(%arg0: i32, %arg1: i32, %arg2: memref<2x64xf32, #tpu.memory_space<vmem>>, %arg3: memref<2x32xf32, #tpu.memory_space<vmem>>) attributes {dimension_semantics = [#tpu.dimension_semantics<parallel>, #tpu.dimension_semantics<parallel>], iteration_bounds = array<i64: 1, 1>, scalar_prefetch = 0 : i64, scratch_operands = 0 : i64, tpu.core_type = #tpu.core_type<tc>, window_params = [{transform_indices = @transform_0, window_bounds = array<i64: 2, 64>}, {transform_indices = @transform_1, window_bounds = array<i64: 2, 32>}]} {
    %0 = tpu.iota {dimensions = array<i32: 0>} : vector<64x32xi32>
    %1 = tpu.iota {dimensions = array<i32: 1>} : vector<64x32xi32>
    %c2_i32 = arith.constant 2 : i32
    %2 = vector.broadcast %c2_i32 : i32 to vector<64x32xi32>
    %3 = arith.muli %2, %1 : vector<64x32xi32>
    %4 = arith.cmpi eq, %0, %3 : vector<64x32xi32>
    %5 = arith.extui %4 : vector<64x32xi1> to vector<64x32xi32>
    %6 = arith.sitofp %5 : vector<64x32xi32> to vector<64x32xf32>
    %c2_i32_0 = arith.constant 2 : i32
    %7 = vector.broadcast %c2_i32_0 : i32 to vector<64x32xi32>
    %8 = arith.muli %7, %1 : vector<64x32xi32>
    %c1_i32 = arith.constant 1 : i32
    %9 = vector.broadcast %c1_i32 : i32 to vector<64x32xi32>
    %10 = arith.addi %8, %9 : vector<64x32xi32>
    %11 = arith.cmpi eq, %0, %10 : vector<64x32xi32>
    %12 = arith.extui %11 : vector<64x32xi1> to vector<64x32xi32>
    %13 = arith.sitofp %12 : vector<64x32xi32> to vector<64x32xf32>
    %c0 = arith.constant 0 : index
    %c0_1 = arith.constant 0 : index
    %14 = vector.load %arg2[%c0, %c0_1] : memref<2x64xf32, #tpu.memory_space<vmem>>, vector<2x64xf32>
    %cst = arith.constant dense<0.000000e+00> : vector<2x32xf32>
    %15 = tpu.matmul %14, %6, %cst {dimension_numbers = #tpu.dot_dimension_numbers<[1], [0], [0], [1], [0, 0, 1, 1], [], []>} : vector<2x64xf32>, vector<64x32xf32>, vector<2x32xf32> -> vector<2x32xf32>
    %cst_2 = arith.constant dense<0.000000e+00> : vector<2x32xf32>
    %16 = tpu.matmul %14, %13, %cst_2 {dimension_numbers = #tpu.dot_dimension_numbers<[1], [0], [0], [1], [0, 0, 1, 1], [], []>} : vector<2x64xf32>, vector<64x32xf32>, vector<2x32xf32> -> vector<2x32xf32>
    %17 = arith.maximumf %15, %16 : vector<2x32xf32>
    %c0_3 = arith.constant 0 : index
    %c0_4 = arith.constant 0 : index
    %18 = vector.load %arg3[%c0_3, %c0_4] : memref<2x32xf32, #tpu.memory_space<vmem>>, vector<2x32xf32>
    tpu.vector_store %arg3[%c0_3, %c0_4], %17 {strides = array<i32>} : memref<2x32xf32, #tpu.memory_space<vmem>>, vector<2x32xf32>,
    return
  }
  func.func @transform_0(%arg0: i32, %arg1: i32) -> (i32, i32) {
    %c0_i32 = arith.constant 0 : i32
    return %arg0, %arg1 : i32, i32
  }
  func.func @transform_1(%arg0: i32, %arg1: i32) -> (i32, i32) {
    %c0_i32 = arith.constant 0 : i32
    return %arg0, %arg1 : i32, i32
  }
}

</mosaic_0001>

<llo_original>
// kernel: pool.1
$region0: #{pool.1}
  #allocation0 [shape = 'u32[]', space=smem, size = 0x4, offset = 0x4, fixed_abs, tag = 'smem constant byte address 0x4 - core index']
  #allocation1 [shape = 'u32[144,128]{1,0:T(1,128)}', space=vmem, size = 0x12000, scoped, tag = 'internal scratch']
  %s0 = inlined_call_operand.vmem [shape: f32[2,64], index: 0, kind: input, shape index: {}]
  %s1 = inlined_call_operand.vmem [shape: f32[2,32], index: 1, kind: output, shape index: {}]
  %s2 = sld [smem:[#allocation0]]
  $region14: #{pool.1} parent=0
    _
  %s4 = ssub.s32 1, %s2
  %s5 = scalar_select 0, %s4, %s2
  // Predicated region
  $region2: #{pool.1} parent=0 // pred_check
    _
  $region3: #{pool.1} parent=0 // pred_check_branch
    %7 = sbr.rel (0) target = $region5
  $region4: #{pool.1} parent=0 // pred_region
    _
  $region5: #{pool.1} parent=0 // pred_fallthru
    _
  %v8 = vlaneseq
  %v9 = vshrl.u32 %v8, 7
  %v10 = vadd.s32 %v9, 8
  %v11 = vadd.s32 %v9, 16
  %v12 = vadd.s32 %v9, 24
  %v13 = vadd.s32 %v9, 32
  %v14 = vadd.s32 %v9, 40
  %v15 = vadd.s32 %v9, 48
  %v16 = vadd.s32 %v9, 56
  %v17 = vlaneseq
  %v18 = vand.u32 %v17, 127
  %v19 = vmul.u32 %v18, 2
  %vm20 = vcmp.eq.s32.totalorder %v9, %v19
  %vm21 = vcmp.eq.s32.totalorder %v10, %v19
  %vm22 = vcmp.eq.s32.totalorder %v11, %v19
  %vm23 = vcmp.eq.s32.totalorder %v12, %v19
  %vm24 = vcmp.eq.s32.totalorder %v13, %v19
  %vm25 = vcmp.eq.s32.totalorder %v14, %v19
  %vm26 = vcmp.eq.s32.totalorder %v15, %v19
  %vm27 = vcmp.eq.s32.totalorder %v16, %v19
  %v28 = vsel %vm20, 1, 0
  %v29 = vsel %vm21, 1, 0
  %v30 = vsel %vm22, 1, 0
  %v31 = vsel %vm23, 1, 0
  %v32 = vsel %vm24, 1, 0
  %v33 = vsel %vm25, 1, 0
  %v34 = vsel %vm26, 1, 0
  %v35 = vsel %vm27, 1, 0
  %v36 = vcvt.s32.f32 %v28
  %v37 = vcvt.s32.f32 %v29
  %v38 = vcvt.s32.f32 %v30
  %v39 = vcvt.s32.f32 %v31
  %v40 = vcvt.s32.f32 %v32
  %v41 = vcvt.s32.f32 %v33
  %v42 = vcvt.s32.f32 %v34
  %v43 = vcvt.s32.f32 %v35
  %v44 = vadd.s32 %v19, 1
  %vm45 = vcmp.eq.s32.totalorder %v9, %v44
  %vm46 = vcmp.eq.s32.totalorder %v10, %v44
  %vm47 = vcmp.eq.s32.totalorder %v11, %v44
  %vm48 = vcmp.eq.s32.totalorder %v12, %v44
  %vm49 = vcmp.eq.s32.totalorder %v13, %v44
  %vm50 = vcmp.eq.s32.totalorder %v14, %v44
  %vm51 = vcmp.eq.s32.totalorder %v15, %v44
  %vm52 = vcmp.eq.s32.totalorder %v16, %v44
  %v53 = vsel %vm45, 1, 0
  %v54 = vsel %vm46, 1, 0
  %v55 = vsel %vm47, 1, 0
  %v56 = vsel %vm48, 1, 0
  %v57 = vsel %vm49, 1, 0
  %v58 = vsel %vm50, 1, 0
  %v59 = vsel %vm51, 1, 0
  %v60 = vsel %vm52, 1, 0
  %v61 = vcvt.s32.f32 %v53
  %v62 = vcvt.s32.f32 %v54
  %v63 = vcvt.s32.f32 %v55
  %v64 = vcvt.s32.f32 %v56
  %v65 = vcvt.s32.f32 %v57
  %v66 = vcvt.s32.f32 %v58
  %v67 = vcvt.s32.f32 %v59
  %v68 = vcvt.s32.f32 %v60
  %v69 = vld [vmem:[%s0] sm:$0x3]
  %vm70 = vcmask 523264
  %v72 = vsel %vm70, %v69, 0
  %74 = vmatprep.subr.mxu0 0.0
  %75 = vmatpush1.msra.mxu0 %v36
  %76 = vmatprep.subr.mxu0 0.0
  %77 = vmatpush1.msra.mxu0 %v37
  %78 = vmatprep.subr.mxu0 0.0
  %79 = vmatpush1.msra.mxu0 %v38
  %80 = vmatprep.subr.mxu0 0.0
  %81 = vmatpush1.msra.mxu0 %v39
  %82 = vmatprep.subr.mxu0 0.0
  %83 = vmatpush1.msra.mxu0 %v40
  %84 = vmatprep.subr.mxu0 0.0
  %85 = vmatpush1.msra.mxu0 %v41
  %86 = vmatprep.subr.mxu0 0.0
  %87 = vmatpush1.msra.mxu0 %v42
  %88 = vmatprep.subr.mxu0 0.0
  %89 = vmatpush1.msra.mxu0 %v43
  %90 = vmatprep.subr.mxu0 0.0
  %91 = vmatpush1.msra.mxu0 0.0
  %92 = vmatprep.subr.mxu0 0.0
  %93 = vmatpush1.msra.mxu0 0.0
  %94 = vmatprep.subr.mxu0 0.0
  %95 = vmatpush1.msra.mxu0 0.0
  %96 = vmatprep.subr.mxu0 0.0
  %97 = vmatpush1.msra.mxu0 0.0
  %98 = vmatprep.subr.mxu0 0.0
  %99 = vmatpush1.msra.mxu0 0.0
  %100 = vmatprep.subr.mxu0 0.0
  %101 = vmatpush1.msra.mxu0 0.0
  %102 = vmatprep.subr.mxu0 0.0
  %103 = vmatpush1.msra.mxu0 0.0
  %104 = vmatprep.subr.mxu0 0.0
  %105 = vmatpush1.msra.mxu0 0.0
  %106 = vmatprep.subr.mxu0 0.0
  %107 = vmatpush1.msra.mxu0 0.0
  %108 = vmatprep.subr.mxu0 0.0
  %109 = vmatpush1.msra.mxu0 0.0
  %110 = vmatprep.subr.mxu0 0.0
  %111 = vmatpush1.msra.mxu0 0.0
  %112 = vmatprep.subr.mxu0 0.0
  %113 = vmatpush1.msra.mxu0 0.0
  %114 = vmatprep.subr.mxu0 0.0
  %115 = vmatpush1.msra.mxu0 0.0
  %116 = vmatprep.subr.mxu0 0.0
  %117 = vmatpush1.msra.mxu0 0.0
  %118 = vmatprep.subr.mxu0 0.0
  %119 = vmatpush1.msra.mxu0 0.0
  %120 = vmatprep.subr.mxu0 0.0
  %121 = vmatpush1.msra.mxu0 0.0
  %122 = vmatprep.subr.mxu0 0.0
  %123 = vmatpush1.msra.mxu0 0.0
  %124 = vmatprep.subr.mxu0 0.0
  %125 = vmatpush1.msra.mxu0 0.0
  %126 = vmatprep.subr.mxu0 0.0
  %127 = vmatpush1.msra.mxu0 0.0
  %128 = vmatprep.subr.mxu0 0.0
  %129 = vmatpush1.msra.mxu0 0.0
  %130 = vmatprep.subr.mxu0 0.0
  %131 = vmatpush1.msra.mxu0 0.0
  %132 = vmatprep.subr.mxu0 0.0
  %133 = vmatpush1.msra.mxu0 0.0
  %134 = vmatprep.subr.mxu0 0.0
  %135 = vmatpush1.msra.mxu0 0.0
  %136 = vmatprep.subr.mxu0 0.0
  %137 = vmatpush1.msra.mxu0 0.0
  %138 = vmatprep.mubr.f32.mxu0 0.0
  %139 = vmatmul.mubr.f32.gmra.mrb[0].mxu0 %v72
  %v140 = vpop.f32.mrb[0].mxu0
  %v141 = vadd.f32 0.0, %v140
  %v142 = vpop.f32.mrb[0].mxu0
  %143 = vdwg.mxu0
  %144 = vmatprep.subr.mxu0 0.0
  %145 = vmatpush1.msra.mxu0 %v61
  %146 = vmatprep.subr.mxu0 0.0
  %147 = vmatpush1.msra.mxu0 %v62
  %148 = vmatprep.subr.mxu0 0.0
  %149 = vmatpush1.msra.mxu0 %v63
  %150 = vmatprep.subr.mxu0 0.0
  %151 = vmatpush1.msra.mxu0 %v64
  %152 = vmatprep.subr.mxu0 0.0
  %153 = vmatpush1.msra.mxu0 %v65
  %154 = vmatprep.subr.mxu0 0.0
  %155 = vmatpush1.msra.mxu0 %v66
  %156 = vmatprep.subr.mxu0 0.0
  %157 = vmatpush1.msra.mxu0 %v67
  %158 = vmatprep.subr.mxu0 0.0
  %159 = vmatpush1.msra.mxu0 %v68
  %160 = vmatprep.subr.mxu0 0.0
  %161 = vmatpush1.msra.mxu0 0.0
  %162 = vmatprep.subr.mxu0 0.0
  %163 = vmatpush1.msra.mxu0 0.0
  %164 = vmatprep.subr.mxu0 0.0
  %165 = vmatpush1.msra.mxu0 0.0
  %166 = vmatprep.subr.mxu0 0.0
  %167 = vmatpush1.msra.mxu0 0.0
  %168 = vmatprep.subr.mxu0 0.0
  %169 = vmatpush1.msra.mxu0 0.0
  %170 = vmatprep.subr.mxu0 0.0
  %171 = vmatpush1.msra.mxu0 0.0
  %172 = vmatprep.subr.mxu0 0.0
  %173 = vmatpush1.msra.mxu0 0.0
  %174 = vmatprep.subr.mxu0 0.0
  %175 = vmatpush1.msra.mxu0 0.0
  %176 = vmatprep.subr.mxu0 0.0
  %177 = vmatpush1.msra.mxu0 0.0
  %178 = vmatprep.subr.mxu0 0.0
  %179 = vmatpush1.msra.mxu0 0.0
  %180 = vmatprep.subr.mxu0 0.0
  %181 = vmatpush1.msra.mxu0 0.0
  %182 = vmatprep.subr.mxu0 0.0
  %183 = vmatpush1.msra.mxu0 0.0
  %184 = vmatprep.subr.mxu0 0.0
  %185 = vmatpush1.msra.mxu0 0.0
  %186 = vmatprep.subr.mxu0 0.0
  %187 = vmatpush1.msra.mxu0 0.0
  %188 = vmatprep.subr.mxu0 0.0
  %189 = vmatpush1.msra.mxu0 0.0
  %190 = vmatprep.subr.mxu0 0.0
  %191 = vmatpush1.msra.mxu0 0.0
  %192 = vmatprep.subr.mxu0 0.0
  %193 = vmatpush1.msra.mxu0 0.0
  %194 = vmatprep.subr.mxu0 0.0
  %195 = vmatpush1.msra.mxu0 0.0
  %196 = vmatprep.subr.mxu0 0.0
  %197 = vmatpush1.msra.mxu0 0.0
  %198 = vmatprep.subr.mxu0 0.0
  %199 = vmatpush1.msra.mxu0 0.0
  %200 = vmatprep.subr.mxu0 0.0
  %201 = vmatpush1.msra.mxu0 0.0
  %202 = vmatprep.subr.mxu0 0.0
  %203 = vmatpush1.msra.mxu0 0.0
  %204 = vmatprep.subr.mxu0 0.0
  %205 = vmatpush1.msra.mxu0 0.0
  %206 = vmatprep.subr.mxu0 0.0
  %207 = vmatpush1.msra.mxu0 0.0
  %208 = vmatprep.mubr.f32.mxu0 0.0
  %209 = vmatmul.mubr.f32.gmra.mrb[0].mxu0 %v72
  %v210 = vpop.f32.mrb[0].mxu0
  %v211 = vadd.f32 0.0, %v210
  %v212 = vpop.f32.mrb[0].mxu0
  %213 = vdwg.mxu0
  %v214 = vmax.f32 %v141, %v211
  %vm215 = vcmask 254976
  %216 = vst.msk [vmem:[%s1] sm:$0x3] %vm215, %v214
  // Predicated region
  $region6: #{pool.1} parent=0 // pred_check
    _
  $region7: #{pool.1} parent=0 // pred_check_branch
    %218 = sbr.rel (0) target = $region9
  $region8: #{pool.1} parent=0 // pred_region
    _
  $region9: #{pool.1} parent=0 // pred_fallthru
    _
  // Predicated region
  $region10: #{pool.1} parent=0 // pred_check
    _
  $region11: #{pool.1} parent=0 // pred_check_branch
    %220 = sbr.rel (0) target = $region13
  $region12: #{pool.1} parent=0 // pred_region
    _
  $region13: #{pool.1} parent=0 // pred_fallthru
    _

</llo_original>
